<compile_context>
chip_gen: v7x
topology: tpu7x:2x2x1
jax: 0.10.0
libtpu: 0.0.40
codegen_flags: <defaults>
</compile_context>

<pallas_src>
import jax
import jax.numpy as jnp
from jax.experimental import pallas as pl
from jax.experimental.pallas import tpu as pltpu

# SELU constants (same as torch.nn.SELU)
_SELU_ALPHA = 1.6732632423543772848170429916717
_SELU_SCALE = 1.0507009873554804934193349852946

# Original / lane-padded feature widths. Output width stays 200 (full-dim block).
_D0, _D1, _D2, _D3 = 1, 80, 140, 200
_D1P, _D2P = 128, 256


def _selu_unscaled(x):
    # SELU without the outer scale (scale is folded into the next layer's weights,
    # or applied once on the final layer): where(x>0, x, alpha*exp(x) - alpha).
    # No exp clamp: the inf produced in the unselected branch is discarded by
    # jnp.where (forward pass only).
    return jnp.where(x > 0, x, _SELU_ALPHA * jnp.exp(x) - _SELU_ALPHA)


def _round_up(n, m):
    return ((n + m - 1) // m) * m


def _pad_to(a, shape):
    return jnp.pad(a, [(0, s - d) for d, s in zip(a.shape, shape)])


def _default_selu_dtype():
    """bf16 elementwise epilogue on chips with bf16 VALU/EUP (v6e/v7x); f32 else."""
    try:
        kind = jax.devices()[0].device_kind.lower()
    except Exception:
        return jnp.float32
    return jnp.bfloat16 if ("v6" in kind or "v7" in kind) else jnp.float32


def prepare_params(params, *, matmul_dtype=jnp.bfloat16, selu_dtype=None):
    """One-time weight prep, hoisted out of the per-call hot path.

    * Pads hidden dims to lane-dense widths (80->128, 140->256); padding is
      exact since SELU(0) == 0, so padded lanes stay identically zero.
    * Folds the SELU scale of layers 1 and 2 into w2 / w3.
    * w2/w3 are stored in `matmul_dtype` (MXU inputs); w1 and all biases in
      `selu_dtype` (the dtype the bias-add + SELU epilogue runs in).
    """
    if selu_dtype is None:
        selu_dtype = _default_selu_dtype()
    w1, b1, w2, b2, w3, b3 = params
    w1p = _pad_to(w1, (1, _D1P)).astype(selu_dtype)
    b1p = _pad_to(b1, (1, _D1P)).astype(selu_dtype)
    w2p = (_SELU_SCALE * _pad_to(w2, (_D1P, _D2P))).astype(matmul_dtype)
    b2p = _pad_to(b2, (1, _D2P)).astype(selu_dtype)
    w3p = (_SELU_SCALE * _pad_to(w3, (_D2P, _D3))).astype(matmul_dtype)  # K-pad only
    b3p = b3.astype(selu_dtype)                                           # (1, 200)
    return (w1p, b1p, w2p, b2p, w3p, b3p)


def mlp_day_kernel(x_ref, w1_ref, b1_ref, w2_ref, b2_ref, w3_ref, b3_ref, o_ref):
    ew = b1_ref.dtype   # elementwise (bias + SELU) dtype: bf16 on v6e/v7x, f32 on v5e
    mm = w2_ref.dtype   # MXU input dtype
    x = x_ref[...].astype(ew)                                   # (tb, 1)
    # Layer 1 (K=1): broadcast outer product on the VPU.
    g1 = _selu_unscaled(x * w1_ref[...] + b1_ref[...])          # (tb, 128)
    # Layers 2/3: MXU matmuls with f32 accumulation; SELU scale pre-folded into w2/w3.
    z2 = jnp.dot(g1.astype(mm), w2_ref[...],
                 preferred_element_type=jnp.float32).astype(ew) + b2_ref[...]
    g2 = _selu_unscaled(z2)                                      # (tb, 256)
    z3 = jnp.dot(g2.astype(mm), w3_ref[...],
                 preferred_element_type=jnp.float32).astype(ew) + b3_ref[...]
    # Final layer applies the single remaining SELU scale; output written at the
    # true width (200) -- no post-kernel slice copy.
    o_ref[...] = (_SELU_SCALE * _selu_unscaled(z3)).astype(o_ref.dtype)


def mlp_day_forward(x, prepared_params, *, tb=2048,
                    vmem_limit_bytes=40 * 1024 * 1024):
    """x: (B, 1) float32. Returns (B, 200) float32. `prepared_params` from prepare_params()."""
    w1p, b1p, w2p, b2p, w3p, b3p = prepared_params
    B = x.shape[0]

    # Batch tile: clamp for small batches; pad rows up to a whole number of tiles.
    tb_eff = min(_round_up(tb, 8), _round_up(B, 8))
    n_steps = -(-B // tb_eff)
    if n_steps > 1 and n_steps % 2 == 1:
        n_steps += 1            # v7x: even grid keeps both TensorCores balanced
    Bp = n_steps * tb_eff
    if Bp != B:
        x = jnp.pad(x, ((0, Bp - B), (0, 0)))

    def full_spec(shape):
        n = len(shape)
        # Whole array, replicated across the batch grid (DMAs elided after step 0).
        return pl.BlockSpec(shape, lambda i: (0,) * n)

    out = pl.pallas_call(
        mlp_day_kernel,
        out_shape=jax.ShapeDtypeStruct((Bp, _D3), jnp.float32),
        grid_spec=pltpu.PrefetchScalarGridSpec(
            num_scalar_prefetch=0,
            grid=(n_steps,),
            in_specs=[
                pl.BlockSpec((tb_eff, 1), lambda i: (i, 0)),   # x tile
                full_spec(w1p.shape), full_spec(b1p.shape),
                full_spec(w2p.shape), full_spec(b2p.shape),
                full_spec(w3p.shape), full_spec(b3p.shape),
            ],
            out_specs=pl.BlockSpec((tb_eff, _D3), lambda i: (i, 0)),
        ),
        compiler_params=pltpu.CompilerParams(
            dimension_semantics=("parallel",),     # v7x: shard batch over both TCs
            vmem_limit_bytes=vmem_limit_bytes,     # <=~40 MiB: safe on v7x 64 MiB VMEM
        ),
    )(x, w1p, b1p, w2p, b2p, w3p, b3p)

    return out if Bp == B else out[:B]


def init_params(key):
    """Deterministic synthetic params, shapes matching MLPDay.__init__.

    PyTorch Linear: weight (out, in), bias (out). We store weight transposed
    as (in, out) and bias as (1, out) for in-kernel broadcasting.
    """
    dims = [(_D0, _D1), (_D1, _D2), (_D2, _D3)]
    params = []
    for (fan_in, fan_out) in dims:
        key, kw, kb = jax.random.split(key, 3)
        bound = 1.0 / jnp.sqrt(fan_in)
        w = jax.random.uniform(kw, (fan_in, fan_out), jnp.float32, -bound, bound)
        b = jax.random.uniform(kb, (1, fan_out), jnp.float32, -bound, bound)
        params += [w, b]
    return tuple(params)


def _selu_ref(x):
    return _SELU_SCALE * jnp.where(x > 0, x, _SELU_ALPHA * (jnp.exp(x) - 1.0))


def reference_forward(x, params):
    """Pure-JAX f32 reference (standard SELU, no scale folding)."""
    w1, b1, w2, b2, w3, b3 = params
    h = _selu_ref(x * w1 + b1)      # (B,1)*(1,80) == x @ w1
    h = _selu_ref(h @ w2 + b2)
    return _selu_ref(h @ w3 + b3)


if __name__ == "__main__":
    key = jax.random.PRNGKey(0)
    key, kx = jax.random.split(key)
    B = 64                                    # small test batch
    x = jax.random.normal(kx, (B, 1), jnp.float32)
    params = init_params(key)
    ref = reference_forward(x, params)

    # 1) Full-f32 path: tight check of the fused kernel, lane padding, scale folding.
    p_f32 = prepare_params(params, matmul_dtype=jnp.float32, selu_dtype=jnp.float32)
    out_f32 = jax.block_until_ready(mlp_day_forward(x, p_f32))
    assert out_f32.shape == (B, _D3), out_f32.shape
    err_f32 = float(jnp.max(jnp.abs(out_f32 - ref)))
    assert err_f32 < 1e-3, err_f32

    # 2) Non-divisible batch: exercises the wrapper-side row-padding path.
    B2 = 37
    out_tail = jax.block_until_ready(mlp_day_forward(x[:B2], p_f32))
    assert out_tail.shape == (B2, _D3), out_tail.shape
    err_tail = float(jnp.max(jnp.abs(out_tail - ref[:B2])))
    assert err_tail < 1e-3, err_tail

    # 3) Multi-step grid: forces n_steps > 1 and the even-grid rounding (v7x balance).
    out_grid = jax.block_until_ready(mlp_day_forward(x[:B2], p_f32, tb=16))
    assert out_grid.shape == (B2, _D3), out_grid.shape
    err_grid = float(jnp.max(jnp.abs(out_grid - ref[:B2])))
    assert err_grid < 1e-3, err_grid

    # 4) Fast default path (bf16 MXU; bf16 epilogue on v6e/v7x, f32 on v5e): sanity bound.
    p_fast = prepare_params(params)
    out_fast = jax.block_until_ready(mlp_day_forward(x, p_fast))
    assert out_fast.shape == (B, _D3), out_fast.shape
    err_fast = float(jnp.max(jnp.abs(out_fast - ref)))
    assert err_fast < 1.0, err_fast

    print("KERNEL_OK")
</pallas_src>

<mosaic_0001>
module attributes {stable_mosaic.version = 11 : i64} {
  func.func @mlp_day_kernel(%arg0: i32, %arg1: memref<64x1xf32, #tpu.memory_space<vmem>>, %arg2: memref<1x128xf32, #tpu.memory_space<vmem>>, %arg3: memref<1x128xf32, #tpu.memory_space<vmem>>, %arg4: memref<128x256xf32, #tpu.memory_space<vmem>>, %arg5: memref<1x256xf32, #tpu.memory_space<vmem>>, %arg6: memref<256x200xf32, #tpu.memory_space<vmem>>, %arg7: memref<1x200xf32, #tpu.memory_space<vmem>>, %arg8: memref<64x200xf32, #tpu.memory_space<vmem>>) attributes {dimension_semantics = [#tpu.dimension_semantics<parallel>], iteration_bounds = array<i64: 1>, scalar_prefetch = 0 : i64, scratch_operands = 0 : i64, tpu.core_type = #tpu.core_type<tc>, window_params = [{transform_indices = @transform_0, window_bounds = array<i64: 64, 1>}, {pipeline_mode = #tpu.pipeline_mode<synchronous>, transform_indices = @transform_1, window_bounds = array<i64: 1, 128>}, {pipeline_mode = #tpu.pipeline_mode<synchronous>, transform_indices = @transform_2, window_bounds = array<i64: 1, 128>}, {pipeline_mode = #tpu.pipeline_mode<synchronous>, transform_indices = @transform_3, window_bounds = array<i64: 128, 256>}, {pipeline_mode = #tpu.pipeline_mode<synchronous>, transform_indices = @transform_4, window_bounds = array<i64: 1, 256>}, {pipeline_mode = #tpu.pipeline_mode<synchronous>, transform_indices = @transform_5, window_bounds = array<i64: 256, 200>}, {pipeline_mode = #tpu.pipeline_mode<synchronous>, transform_indices = @transform_6, window_bounds = array<i64: 1, 200>}, {transform_indices = @transform_7, window_bounds = array<i64: 64, 200>}]} {
    %c0 = arith.constant 0 : index
    %c0_0 = arith.constant 0 : index
    %0 = vector.load %arg1[%c0, %c0_0] : memref<64x1xf32, #tpu.memory_space<vmem>>, vector<64x1xf32>
    %c0_1 = arith.constant 0 : index
    %c0_2 = arith.constant 0 : index
    %1 = vector.load %arg2[%c0_1, %c0_2] : memref<1x128xf32, #tpu.memory_space<vmem>>, vector<1x128xf32>
    %2 = vector.broadcast %0 : vector<64x1xf32> to vector<64x128xf32>
    %3 = vector.broadcast %1 : vector<1x128xf32> to vector<64x128xf32>
    %4 = arith.mulf %2, %3 : vector<64x128xf32>
    %c0_3 = arith.constant 0 : index
    %c0_4 = arith.constant 0 : index
    %5 = vector.load %arg3[%c0_3, %c0_4] : memref<1x128xf32, #tpu.memory_space<vmem>>, vector<1x128xf32>
    %6 = vector.broadcast %5 : vector<1x128xf32> to vector<64x128xf32>
    %7 = arith.addf %4, %6 : vector<64x128xf32>
    %cst = arith.constant 0.000000e+00 : f32
    %8 = vector.broadcast %cst : f32 to vector<64x128xf32>
    %9 = arith.cmpf ogt, %7, %8 : vector<64x128xf32>
    %10 = math.exp %7 : vector<64x128xf32>
    %cst_5 = arith.constant 1.67326319 : f32
    %11 = vector.broadcast %cst_5 : f32 to vector<64x128xf32>
    %12 = arith.mulf %11, %10 : vector<64x128xf32>
    %cst_6 = arith.constant 1.67326319 : f32
    %13 = vector.broadcast %cst_6 : f32 to vector<64x128xf32>
    %14 = arith.subf %12, %13 : vector<64x128xf32>
    %15 = arith.select %9, %7, %14 : vector<64x128xi1>, vector<64x128xf32>
    %c0_7 = arith.constant 0 : index
    %c0_8 = arith.constant 0 : index
    %16 = vector.load %arg4[%c0_7, %c0_8] : memref<128x256xf32, #tpu.memory_space<vmem>>, vector<128x256xf32>
    %cst_9 = arith.constant dense<0.000000e+00> : vector<64x256xf32>
    %17 = tpu.matmul %15, %16, %cst_9 {dimension_numbers = #tpu.dot_dimension_numbers<[1], [0], [0], [1], [0, 0, 1, 1], [], []>} : vector<64x128xf32>, vector<128x256xf32>, vector<64x256xf32> -> vector<64x256xf32>
    %c0_10 = arith.constant 0 : index
    %c0_11 = arith.constant 0 : index
    %18 = vector.load %arg5[%c0_10, %c0_11] : memref<1x256xf32, #tpu.memory_space<vmem>>, vector<1x256xf32>
    %19 = vector.broadcast %18 : vector<1x256xf32> to vector<64x256xf32>
    %20 = arith.addf %17, %19 : vector<64x256xf32>
    %cst_12 = arith.constant 0.000000e+00 : f32
    %21 = vector.broadcast %cst_12 : f32 to vector<64x256xf32>
    %22 = arith.cmpf ogt, %20, %21 : vector<64x256xf32>
    %23 = math.exp %20 : vector<64x256xf32>
    %cst_13 = arith.constant 1.67326319 : f32
    %24 = vector.broadcast %cst_13 : f32 to vector<64x256xf32>
    %25 = arith.mulf %24, %23 : vector<64x256xf32>
    %cst_14 = arith.constant 1.67326319 : f32
    %26 = vector.broadcast %cst_14 : f32 to vector<64x256xf32>
    %27 = arith.subf %25, %26 : vector<64x256xf32>
    %28 = arith.select %22, %20, %27 : vector<64x256xi1>, vector<64x256xf32>
    %c0_15 = arith.constant 0 : index
    %c0_16 = arith.constant 0 : index
    %29 = vector.load %arg6[%c0_15, %c0_16] : memref<256x200xf32, #tpu.memory_space<vmem>>, vector<256x200xf32>
    %cst_17 = arith.constant dense<0.000000e+00> : vector<64x200xf32>
    %30 = tpu.matmul %28, %29, %cst_17 {dimension_numbers = #tpu.dot_dimension_numbers<[1], [0], [0], [1], [0, 0, 1, 1], [], []>} : vector<64x256xf32>, vector<256x200xf32>, vector<64x200xf32> -> vector<64x200xf32>
    %c0_18 = arith.constant 0 : index
    %c0_19 = arith.constant 0 : index
    %31 = vector.load %arg7[%c0_18, %c0_19] : memref<1x200xf32, #tpu.memory_space<vmem>>, vector<1x200xf32>
    %32 = vector.broadcast %31 : vector<1x200xf32> to vector<64x200xf32>
    %33 = arith.addf %30, %32 : vector<64x200xf32>
    %cst_20 = arith.constant 0.000000e+00 : f32
    %34 = vector.broadcast %cst_20 : f32 to vector<64x200xf32>
    %35 = arith.cmpf ogt, %33, %34 : vector<64x200xf32>
    %36 = math.exp %33 : vector<64x200xf32>
    %cst_21 = arith.constant 1.67326319 : f32
    %37 = vector.broadcast %cst_21 : f32 to vector<64x200xf32>
    %38 = arith.mulf %37, %36 : vector<64x200xf32>
    %cst_22 = arith.constant 1.67326319 : f32
    %39 = vector.broadcast %cst_22 : f32 to vector<64x200xf32>
    %40 = arith.subf %38, %39 : vector<64x200xf32>
    %41 = arith.select %35, %33, %40 : vector<64x200xi1>, vector<64x200xf32>
    %cst_23 = arith.constant 1.05070102 : f32
    %42 = vector.broadcast %cst_23 : f32 to vector<64x200xf32>
    %43 = arith.mulf %42, %41 : vector<64x200xf32>
    %c0_24 = arith.constant 0 : index
    %c0_25 = arith.constant 0 : index
    %44 = vector.load %arg8[%c0_24, %c0_25] : memref<64x200xf32, #tpu.memory_space<vmem>>, vector<64x200xf32>
    tpu.vector_store %arg8[%c0_24, %c0_25], %43 {strides = array<i32>} : memref<64x200xf32, #tpu.memory_space<vmem>>, vector<64x200xf32>,
    return
  }
  func.func @transform_0(%arg0: i32) -> (i32, i32) {
    %c0_i32 = arith.constant 0 : i32
    %c0_i32_0 = arith.constant 0 : i32
    return %arg0, %c0_i32 : i32, i32
  }
  func.func @transform_1(%arg0: i32) -> (i32, i32) {
    %c0_i32 = arith.constant 0 : i32
    %c0_i32_0 = arith.constant 0 : i32
    %c0_i32_1 = arith.constant 0 : i32
    return %c0_i32, %c0_i32_0 : i32, i32
  }
  func.func @transform_2(%arg0: i32) -> (i32, i32) {
    %c0_i32 = arith.constant 0 : i32
    %c0_i32_0 = arith.constant 0 : i32
    %c0_i32_1 = arith.constant 0 : i32
    return %c0_i32, %c0_i32_0 : i32, i32
  }
  func.func @transform_3(%arg0: i32) -> (i32, i32) {
    %c0_i32 = arith.constant 0 : i32
    %c0_i32_0 = arith.constant 0 : i32
    %c0_i32_1 = arith.constant 0 : i32
    return %c0_i32, %c0_i32_0 : i32, i32
  }
  func.func @transform_4(%arg0: i32) -> (i32, i32) {
    %c0_i32 = arith.constant 0 : i32
    %c0_i32_0 = arith.constant 0 : i32
    %c0_i32_1 = arith.constant 0 : i32
    return %c0_i32, %c0_i32_0 : i32, i32
  }
  func.func @transform_5(%arg0: i32) -> (i32, i32) {
    %c0_i32 = arith.constant 0 : i32
    %c0_i32_0 = arith.constant 0 : i32
    %c0_i32_1 = arith.constant 0 : i32
    return %c0_i32, %c0_i32_0 : i32, i32
  }
  func.func @transform_6(%arg0: i32) -> (i32, i32) {
    %c0_i32 = arith.constant 0 : i32
    %c0_i32_0 = arith.constant 0 : i32
    %c0_i32_1 = arith.constant 0 : i32
    return %c0_i32, %c0_i32_0 : i32, i32
  }
  func.func @transform_7(%arg0: i32) -> (i32, i32) {
    %c0_i32 = arith.constant 0 : i32
    %c0_i32_0 = arith.constant 0 : i32
    return %arg0, %c0_i32 : i32, i32
  }
}

</mosaic_0001>

<llo_original>
// kernel: tpu_custom_call.1
$region0: #{tpu_custom_call.1}
  #allocation0 [shape = 'u32[]', space=smem, size = 0x4, offset = 0x4, fixed_abs, tag = 'smem constant byte address 0x4 - core index']
  #allocation1 [shape = 'u32[144,128]{1,0:T(1,128)}', space=vmem, size = 0x12000, scoped, tag = 'internal scratch']
  %s0 = inlined_call_operand.vmem [shape: f32[64,1], index: 0, kind: input, shape index: {}]
  %s1 = inlined_call_operand.vmem [shape: f32[1,128], index: 1, kind: input, shape index: {}]
  %s2 = inlined_call_operand.vmem [shape: f32[1,128], index: 2, kind: input, shape index: {}]
  %s3 = inlined_call_operand.vmem [shape: f32[128,256], index: 3, kind: input, shape index: {}]
  %s4 = inlined_call_operand.vmem [shape: f32[1,256], index: 4, kind: input, shape index: {}]
  %s5 = inlined_call_operand.vmem [shape: f32[256,200], index: 5, kind: input, shape index: {}]
  %s6 = inlined_call_operand.vmem [shape: f32[1,200], index: 6, kind: input, shape index: {}]
  %s7 = inlined_call_operand.hbm [shape: f32[64,200], index: 7, kind: output, shape index: {}]
  %s8 = sld [smem:[#allocation0]]
  $region38: #{tpu_custom_call.1} parent=0
    _
  %s10 = ssub.s32 1, %s8
  %s11 = scalar_select 0, %s10, %s8
  $region1: #{tpu_custom_call.1} parent=0
    #allocation2 [shape = 'u8[65536]{0}', space=vmem, size = 0x10000, scoped, tag = 'output window, operand 0, single buffered']
    #allocation3 [shape = 's32[1]{0}', space=sflag, size = 0x4, scoped, tag = 'scoped memory for tpu_custom_call.1']
    %12 = vsyncpa [#allocation3], 0
    // Predicated region
    $region2: #{tpu_custom_call.1} parent=1 // pred_check
      _
    $region3: #{tpu_custom_call.1} parent=1 // pred_check_branch
      %14 = sbr.rel (0) target = $region5
    $region4: #{tpu_custom_call.1} parent=1 // pred_region
      _
    $region5: #{tpu_custom_call.1} parent=1 // pred_fallthru
      _
    // Predicated region
    $region6: #{tpu_custom_call.1} parent=1 // pred_check
      _
    $region7: #{tpu_custom_call.1} parent=1 // pred_check_branch
      %16 = sbr.rel (0) target = $region9
    $region8: #{tpu_custom_call.1} parent=1 // pred_region
      _
    $region9: #{tpu_custom_call.1} parent=1 // pred_fallthru
      _
    // Predicated region
    $region10: #{tpu_custom_call.1} parent=1 // pred_check
      _
    $region11: #{tpu_custom_call.1} parent=1 // pred_check_branch
      %18 = sbr.rel (0) target = $region13
    $region12: #{tpu_custom_call.1} parent=1 // pred_region
      _
    $region13: #{tpu_custom_call.1} parent=1 // pred_fallthru
      _
    // Predicated region
    $region14: #{tpu_custom_call.1} parent=1 // pred_check
      _
    $region15: #{tpu_custom_call.1} parent=1 // pred_check_branch
      %20 = sbr.rel (0) target = $region17
    $region16: #{tpu_custom_call.1} parent=1 // pred_region
      _
    $region17: #{tpu_custom_call.1} parent=1 // pred_fallthru
      _
    // Predicated region
    $region18: #{tpu_custom_call.1} parent=1 // pred_check
      _
    $region19: #{tpu_custom_call.1} parent=1 // pred_check_branch
      %22 = sbr.rel (0) target = $region21
    $region20: #{tpu_custom_call.1} parent=1 // pred_region
      _
    $region21: #{tpu_custom_call.1} parent=1 // pred_fallthru
      _
    // Predicated region
    $region22: #{tpu_custom_call.1} parent=1 // pred_check
      _
    $region23: #{tpu_custom_call.1} parent=1 // pred_check_branch
      %24 = sbr.rel (0) target = $region25
    $region24: #{tpu_custom_call.1} parent=1 // pred_region
      _
    $region25: #{tpu_custom_call.1} parent=1 // pred_fallthru
      _
    // Predicated region
    $region26: #{tpu_custom_call.1} parent=1 // pred_check
      _
    $region27: #{tpu_custom_call.1} parent=1 // pred_check_branch
      %26 = sbr.rel (0) target = $region29
    $region28: #{tpu_custom_call.1} parent=1 // pred_region
      _
    $region29: #{tpu_custom_call.1} parent=1 // pred_fallthru
      _
    %v27 = vld [vmem:[%s0] sm:$0xff]
    %v28 = vld [vmem:[%s0 + $0x8] sm:$0xff]
    %v29 = vld [vmem:[%s0 + $0x10] sm:$0xff]
    %v30 = vld [vmem:[%s0 + $0x18] sm:$0xff]
    %v31 = vld [vmem:[%s0 + $0x20] sm:$0xff]
    %v32 = vld [vmem:[%s0 + $0x28] sm:$0xff]
    %v33 = vld [vmem:[%s0 + $0x30] sm:$0xff]
    %v34 = vld [vmem:[%s0 + $0x38] sm:$0xff]
    %v35 = vld [vmem:[%s1] sm:$0x1]
    %37 = vset.pattern.permute.xlu0 0
    %38 = vperm.xlu0 %37, %v27
    %v39 = vpop.permute.xlu0 %38
    %42 = vset.pattern.permute.xlu0 0
    %43 = vperm.xlu0 %42, %v28
    %v44 = vpop.permute.xlu0 %43
    %47 = vset.pattern.permute.xlu0 0
    %48 = vperm.xlu0 %47, %v29
    %v49 = vpop.permute.xlu0 %48
    %52 = vset.pattern.permute.xlu0 0
    %53 = vperm.xlu0 %52, %v30
    %v54 = vpop.permute.xlu0 %53
    %57 = vset.pattern.permute.xlu0 0
    %58 = vperm.xlu0 %57, %v31
    %v59 = vpop.permute.xlu0 %58
    %62 = vset.pattern.permute.xlu0 0
    %63 = vperm.xlu0 %62, %v32
    %v64 = vpop.permute.xlu0 %63
    %67 = vset.pattern.permute.xlu0 0
    %68 = vperm.xlu0 %67, %v33
    %v69 = vpop.permute.xlu0 %68
    %72 = vset.pattern.permute.xlu0 0
    %73 = vperm.xlu0 %72, %v34
    %v74 = vpop.permute.xlu0 %73
    %v77 = vlaneseq
    %v78 = vshrl.u32 %v77, 7
    %v79 = vsub.s32 0, %v78
    %v80 = vrot.slane %v35, %v79
    %v82 = vmul.f32 %v39, %v80
    %v83 = vmul.f32 %v44, %v80
    %v84 = vmul.f32 %v49, %v80
    %v85 = vmul.f32 %v54, %v80
    %v86 = vmul.f32 %v59, %v80
    %v87 = vmul.f32 %v64, %v80
    %v88 = vmul.f32 %v69, %v80
    %v89 = vmul.f32 %v74, %v80
    %v90 = vld [vmem:[%s2] sm:$0x1]
    %v92 = vlaneseq
    %v93 = vshrl.u32 %v92, 7
    %v94 = vsub.s32 0, %v93
    %v95 = vrot.slane %v90, %v94
    %v97 = vadd.f32 %v82, %v95
    %v98 = vadd.f32 %v83, %v95
    %v99 = vadd.f32 %v84, %v95
    %v100 = vadd.f32 %v85, %v95
    %v101 = vadd.f32 %v86, %v95
    %v102 = vadd.f32 %v87, %v95
    %v103 = vadd.f32 %v88, %v95
    %v104 = vadd.f32 %v89, %v95
    %vm105 = vcmp.gt.f32.partialorder %v97, 0.0
    %vm106 = vcmp.gt.f32.partialorder %v98, 0.0
    %vm107 = vcmp.gt.f32.partialorder %v99, 0.0
    %vm108 = vcmp.gt.f32.partialorder %v100, 0.0
    %vm109 = vcmp.gt.f32.partialorder %v101, 0.0
    %vm110 = vcmp.gt.f32.partialorder %v102, 0.0
    %vm111 = vcmp.gt.f32.partialorder %v103, 0.0
    %vm112 = vcmp.gt.f32.partialorder %v104, 0.0
    %v113 = vmul.f32 %v97, 1.442695
    %v114 = vpow.pop %v113
    %v115 = vmul.f32 %v98, 1.442695
    %v116 = vpow.pop %v115
    %v117 = vmul.f32 %v99, 1.442695
    %v118 = vpow.pop %v117
    %v119 = vmul.f32 %v100, 1.442695
    %v120 = vpow.pop %v119
    %v121 = vmul.f32 %v101, 1.442695
    %v122 = vpow.pop %v121
    %v123 = vmul.f32 %v102, 1.442695
    %v124 = vpow.pop %v123
    %v125 = vmul.f32 %v103, 1.442695
    %v126 = vpow.pop %v125
    %v127 = vmul.f32 %v104, 1.442695
    %v128 = vpow.pop %v127
    %v129 = vmul.f32 %v114, 1.6732632
    %v130 = vmul.f32 %v116, 1.6732632
    %v131 = vmul.f32 %v118, 1.6732632
    %v132 = vmul.f32 %v120, 1.6732632
    %v133 = vmul.f32 %v122, 1.6732632
    %v134 = vmul.f32 %v124, 1.6732632
    %v135 = vmul.f32 %v126, 1.6732632
    %v136 = vmul.f32 %v128, 1.6732632
    %v137 = vsub.f32 %v129, 1.6732632
    %v138 = vsub.f32 %v130, 1.6732632
    %v139 = vsub.f32 %v131, 1.6732632
    %v140 = vsub.f32 %v132, 1.6732632
    %v141 = vsub.f32 %v133, 1.6732632
    %v142 = vsub.f32 %v134, 1.6732632
    %v143 = vsub.f32 %v135, 1.6732632
    %v144 = vsub.f32 %v136, 1.6732632
    %v145 = vsel %vm105, %v97, %v137
    %v146 = vsel %vm106, %v98, %v138
    %v147 = vsel %vm107, %v99, %v139
    %v148 = vsel %vm108, %v100, %v140
    %v149 = vsel %vm109, %v101, %v141
    %v150 = vsel %vm110, %v102, %v142
    %v151 = vsel %vm111, %v103, %v143
    %v152 = vsel %vm112, %v104, %v144
    %v153 = vld [vmem:[%s3] sm:$0xff]
    %v154 = vld [vmem:[%s3 + $0x8] sm:$0xff]
    %v155 = vld [vmem:[%s3 + $0x10] sm:$0xff]
    %v156 = vld [vmem:[%s3 + $0x18] sm:$0xff]
    %v157 = vld [vmem:[%s3 + $0x20] sm:$0xff]
    %v158 = vld [vmem:[%s3 + $0x28] sm:$0xff]
    %v159 = vld [vmem:[%s3 + $0x30] sm:$0xff]
    %v160 = vld [vmem:[%s3 + $0x38] sm:$0xff]
    %v161 = vld [vmem:[%s3 + $0x40] sm:$0xff]
    %v162 = vld [vmem:[%s3 + $0x48] sm:$0xff]
    %v163 = vld [vmem:[%s3 + $0x50] sm:$0xff]
    %v164 = vld [vmem:[%s3 + $0x58] sm:$0xff]
    %v165 = vld [vmem:[%s3 + $0x60] sm:$0xff]
    %v166 = vld [vmem:[%s3 + $0x68] sm:$0xff]
    %v167 = vld [vmem:[%s3 + $0x70] sm:$0xff]
    %v168 = vld [vmem:[%s3 + $0x78] sm:$0xff]
    %v169 = vld [vmem:[%s3 + $0x80] sm:$0xff]
    %v170 = vld [vmem:[%s3 + $0x88] sm:$0xff]
    %v171 = vld [vmem:[%s3 + $0x90] sm:$0xff]
    %v172 = vld [vmem:[%s3 + $0x98] sm:$0xff]
    %v173 = vld [vmem:[%s3 + $0xa0] sm:$0xff]
    %v174 = vld [vmem:[%s3 + $0xa8] sm:$0xff]
    %v175 = vld [vmem:[%s3 + $0xb0] sm:$0xff]
    %v176 = vld [vmem:[%s3 + $0xb8] sm:$0xff]
    %v177 = vld [vmem:[%s3 + $0xc0] sm:$0xff]
    %v178 = vld [vmem:[%s3 + $0xc8] sm:$0xff]
    %v179 = vld [vmem:[%s3 + $0xd0] sm:$0xff]
    %v180 = vld [vmem:[%s3 + $0xd8] sm:$0xff]
    %v181 = vld [vmem:[%s3 + $0xe0] sm:$0xff]
    %v182 = vld [vmem:[%s3 + $0xe8] sm:$0xff]
    %v183 = vld [vmem:[%s3 + $0xf0] sm:$0xff]
    %v184 = vld [vmem:[%s3 + $0xf8] sm:$0xff]
    %v185 = vld [vmem:[%s4] sm:$0x3]
    %v187 = vlaneseq
    %v188 = vshrl.u32 %v187, 7
    %v189 = vsub.s32 0, %v188
    %v190 = vrot.slane %v185, %v189
    %v191 = vlaneseq
    %v192 = vshrl.u32 %v191, 7
    %v193 = vsub.s32 1, %v192
    %v194 = vrot.slane %v185, %v193
    %197 = vmatprep.subr.mxu0 %v154
    %198 = vmatpush1.msra.mxu0 %v153
    %199 = vmatprep.subr.mxu0 %v156
    %200 = vmatpush1.msra.mxu0 %v155
    %201 = vmatprep.subr.mxu0 %v158
    %202 = vmatpush1.msra.mxu0 %v157
    %203 = vmatprep.subr.mxu0 %v160
    %204 = vmatpush1.msra.mxu0 %v159
    %205 = vmatprep.subr.mxu0 %v162
    %206 = vmatpush1.msra.mxu0 %v161
    %207 = vmatprep.subr.mxu0 %v164
    %208 = vmatpush1.msra.mxu0 %v163
    %209 = vmatprep.subr.mxu0 %v166
    %210 = vmatpush1.msra.mxu0 %v165
    %211 = vmatprep.subr.mxu0 %v168
    %212 = vmatpush1.msra.mxu0 %v167
    %213 = vmatprep.subr.mxu0 %v170
    %214 = vmatpush1.msra.mxu0 %v169
    %215 = vmatprep.subr.mxu0 %v172
    %216 = vmatpush1.msra.mxu0 %v171
    %217 = vmatprep.subr.mxu0 %v174
    %218 = vmatpush1.msra.mxu0 %v173
    %219 = vmatprep.subr.mxu0 %v176
    %220 = vmatpush1.msra.mxu0 %v175
    %221 = vmatprep.subr.mxu0 %v178
    %222 = vmatpush1.msra.mxu0 %v177
    %223 = vmatprep.subr.mxu0 %v180
    %224 = vmatpush1.msra.mxu0 %v179
    %225 = vmatprep.subr.mxu0 %v182
    %226 = vmatpush1.msra.mxu0 %v181
    %227 = vmatprep.subr.mxu0 %v184
    %228 = vmatpush1.msra.mxu0 %v183
    %229 = vmatprep.subr.mxu0 0.0
    %230 = vmatpush1.msra.mxu0 0.0
    %231 = vmatprep.subr.mxu0 0.0
    %232 = vmatpush1.msra.mxu0 0.0
    %233 = vmatprep.subr.mxu0 0.0
    %234 = vmatpush1.msra.mxu0 0.0
    %235 = vmatprep.subr.mxu0 0.0
    %236 = vmatpush1.msra.mxu0 0.0
    %237 = vmatprep.subr.mxu0 0.0
    %238 = vmatpush1.msra.mxu0 0.0
    %239 = vmatprep.subr.mxu0 0.0
    %240 = vmatpush1.msra.mxu0 0.0
    %241 = vmatprep.subr.mxu0 0.0
    %242 = vmatpush1.msra.mxu0 0.0
    %243 = vmatprep.subr.mxu0 0.0
    %244 = vmatpush1.msra.mxu0 0.0
    %245 = vmatprep.subr.mxu0 0.0
    %246 = vmatpush1.msra.mxu0 0.0
    %247 = vmatprep.subr.mxu0 0.0
    %248 = vmatpush1.msra.mxu0 0.0
    %249 = vmatprep.subr.mxu0 0.0
    %250 = vmatpush1.msra.mxu0 0.0
    %251 = vmatprep.subr.mxu0 0.0
    %252 = vmatpush1.msra.mxu0 0.0
    %253 = vmatprep.subr.mxu0 0.0
    %254 = vmatpush1.msra.mxu0 0.0
    %255 = vmatprep.subr.mxu0 0.0
    %256 = vmatpush1.msra.mxu0 0.0
    %257 = vmatprep.subr.mxu0 0.0
    %258 = vmatpush1.msra.mxu0 0.0
    %259 = vmatprep.subr.mxu0 0.0
    %260 = vmatpush1.msra.mxu0 0.0
    %261 = vmatprep.mubr.f32.mxu0 0.0
    %262 = vmatmul.mubr.f32.gmra.mrb[0].mxu0 %v145
    %v263 = vpop.f32.mrb[0].mxu0
    %v264 = vadd.f32 %v190, %v263
    %v265 = vpop.f32.mrb[0].mxu0
    %v266 = vadd.f32 %v194, %v265
    %267 = vmatprep.mubr.f32.mxu0 0.0
    %268 = vmatmul.mubr.f32.gmra.mrb[0].mxu0 %v146
    %v269 = vpop.f32.mrb[0].mxu0
    %v270 = vadd.f32 %v190, %v269
    %v271 = vpop.f32.mrb[0].mxu0
    %v272 = vadd.f32 %v194, %v271
    %273 = vmatprep.mubr.f32.mxu0 0.0
    %274 = vmatmul.mubr.f32.gmra.mrb[0].mxu0 %v147
    %v275 = vpop.f32.mrb[0].mxu0
    %v276 = vadd.f32 %v190, %v275
    %v277 = vpop.f32.mrb[0].mxu0
    %v278 = vadd.f32 %v194, %v277
    %279 = vmatprep.mubr.f32.mxu0 0.0
    %280 = vmatmul.mubr.f32.gmra.mrb[0].mxu0 %v148
    %v281 = vpop.f32.mrb[0].mxu0
    %v282 = vadd.f32 %v190, %v281
    %v283 = vpop.f32.mrb[0].mxu0
    %v284 = vadd.f32 %v194, %v283
    %285 = vmatprep.mubr.f32.mxu0 0.0
    %286 = vmatmul.mubr.f32.gmra.mrb[0].mxu0 %v149
    %v287 = vpop.f32.mrb[0].mxu0
    %v288 = vadd.f32 %v190, %v287
    %v289 = vpop.f32.mrb[0].mxu0
    %v290 = vadd.f32 %v194, %v289
    %291 = vmatprep.mubr.f32.mxu0 0.0
    %292 = vmatmul.mubr.f32.gmra.mrb[0].mxu0 %v150
    %v293 = vpop.f32.mrb[0].mxu0
    %v294 = vadd.f32 %v190, %v293
    %v295 = vpop.f32.mrb[0].mxu0
    %v296 = vadd.f32 %v194, %v295
    %297 = vmatprep.mubr.f32.mxu0 0.0
    %298 = vmatmul.mubr.f32.gmra.mrb[0].mxu0 %v151
    %v299 = vpop.f32.mrb[0].mxu0
    %v300 = vadd.f32 %v190, %v299
    %v301 = vpop.f32.mrb[0].mxu0
    %v302 = vadd.f32 %v194, %v301
    %303 = vmatprep.mubr.f32.mxu0 0.0
    %304 = vmatmul.mubr.f32.gmra.mrb[0].mxu0 %v152
    %v305 = vpop.f32.mrb[0].mxu0
    %v306 = vadd.f32 %v190, %v305
    %v307 = vpop.f32.mrb[0].mxu0
    %v308 = vadd.f32 %v194, %v307
    %309 = vdwg.mxu0
    %vm310 = vcmp.gt.f32.partialorder %v264, 0.0
    %vm311 = vcmp.gt.f32.partialorder %v266, 0.0
    %vm312 = vcmp.gt.f32.partialorder %v270, 0.0
    %vm313 = vcmp.gt.f32.partialorder %v272, 0.0
    %vm314 = vcmp.gt.f32.partialorder %v276, 0.0
    %vm315 = vcmp.gt.f32.partialorder %v278, 0.0
    %vm316 = vcmp.gt.f32.partialorder %v282, 0.0
    %vm317 = vcmp.gt.f32.partialorder %v284, 0.0
    %vm318 = vcmp.gt.f32.partialorder %v288, 0.0
    %vm319 = vcmp.gt.f32.partialorder %v290, 0.0
    %vm320 = vcmp.gt.f32.partialorder %v294, 0.0
    %vm321 = vcmp.gt.f32.partialorder %v296, 0.0
    %vm322 = vcmp.gt.f32.partialorder %v300, 0.0
    %vm323 = vcmp.gt.f32.partialorder %v302, 0.0
    %vm324 = vcmp.gt.f32.partialorder %v306, 0.0
    %vm325 = vcmp.gt.f32.partialorder %v308, 0.0
    %v326 = vmul.f32 %v264, 1.442695
    %v327 = vpow.pop %v326
    %v328 = vmul.f32 %v266, 1.442695
    %v329 = vpow.pop %v328
    %v330 = vmul.f32 %v270, 1.442695
    %v331 = vpow.pop %v330
    %v332 = vmul.f32 %v272, 1.442695
    %v333 = vpow.pop %v332
    %v334 = vmul.f32 %v276, 1.442695
    %v335 = vpow.pop %v334
    %v336 = vmul.f32 %v278, 1.442695
    %v337 = vpow.pop %v336
    %v338 = vmul.f32 %v282, 1.442695
    %v339 = vpow.pop %v338
    %v340 = vmul.f32 %v284, 1.442695
    %v341 = vpow.pop %v340
    %v342 = vmul.f32 %v288, 1.442695
    %v343 = vpow.pop %v342
    %v344 = vmul.f32 %v290, 1.442695
    %v345 = vpow.pop %v344
    %v346 = vmul.f32 %v294, 1.442695
    %v347 = vpow.pop %v346
    %v348 = vmul.f32 %v296, 1.442695
    %v349 = vpow.pop %v348
    %v350 = vmul.f32 %v300, 1.442695
    %v351 = vpow.pop %v350
    %v352 = vmul.f32 %v302, 1.442695
    %v353 = vpow.pop %v352
    %v354 = vmul.f32 %v306, 1.442695
    %v355 = vpow.pop %v354
    %v356 = vmul.f32 %v308, 1.442695
    %v357 = vpow.pop %v356
    %v358 = vmul.f32 %v327, 1.6732632
    %v359 = vmul.f32 %v329, 1.6732632
    %v360 = vmul.f32 %v331, 1.6732632
    %v361 = vmul.f32 %v333, 1.6732632
    %v362 = vmul.f32 %v335, 1.6732632
    %v363 = vmul.f32 %v337, 1.6732632
    %v364 = vmul.f32 %v339, 1.6732632
    %v365 = vmul.f32 %v341, 1.6732632
    %v366 = vmul.f32 %v343, 1.6732632
    %v367 = vmul.f32 %v345, 1.6732632
    %v368 = vmul.f32 %v347, 1.6732632
    %v369 = vmul.f32 %v349, 1.6732632
    %v370 = vmul.f32 %v351, 1.6732632
    %v371 = vmul.f32 %v353, 1.6732632
    %v372 = vmul.f32 %v355, 1.6732632
    %v373 = vmul.f32 %v357, 1.6732632
    %v374 = vsub.f32 %v358, 1.6732632
    %v375 = vsub.f32 %v359, 1.6732632
    %v376 = vsub.f32 %v360, 1.6732632
    %v377 = vsub.f32 %v361, 1.6732632
    %v378 = vsub.f32 %v362, 1.6732632
    %v379 = vsub.f32 %v363, 1.6732632
    %v380 = vsub.f32 %v364, 1.6732632
    %v381 = vsub.f32 %v365, 1.6732632
    %v382 = vsub.f32 %v366, 1.6732632
    %v383 = vsub.f32 %v367, 1.6732632
    %v384 = vsub.f32 %v368, 1.6732632
    %v385 = vsub.f32 %v369, 1.6732632
    %v386 = vsub.f32 %v370, 1.6732632
    %v387 = vsub.f32 %v371, 1.6732632
    %v388 = vsub.f32 %v372, 1.6732632
    %v389 = vsub.f32 %v373, 1.6732632
    %v390 = vsel %vm310, %v264, %v374
    %v391 = vsel %vm311, %v266, %v375
    %v392 = vsel %vm312, %v270, %v376
    %v393 = vsel %vm313, %v272, %v377
    %v394 = vsel %vm314, %v276, %v378
    %v395 = vsel %vm315, %v278, %v379
    %v396 = vsel %vm316, %v282, %v380
    %v397 = vsel %vm317, %v284, %v381
    %v398 = vsel %vm318, %v288, %v382
    %v399 = vsel %vm319, %v290, %v383
    %v400 = vsel %vm320, %v294, %v384
    %v401 = vsel %vm321, %v296, %v385
    %v402 = vsel %vm322, %v300, %v386
    %v403 = vsel %vm323, %v302, %v387
    %v404 = vsel %vm324, %v306, %v388
    %v405 = vsel %vm325, %v308, %v389
    %v406 = vld [vmem:[%s5] sm:$0xff]
    %v407 = vld [vmem:[%s5 + $0x8] sm:$0xff]
    %v408 = vld [vmem:[%s5 + $0x10] sm:$0xff]
    %v409 = vld [vmem:[%s5 + $0x18] sm:$0xff]
    %v410 = vld [vmem:[%s5 + $0x20] sm:$0xff]
    %v411 = vld [vmem:[%s5 + $0x28] sm:$0xff]
    %v412 = vld [vmem:[%s5 + $0x30] sm:$0xff]
    %v413 = vld [vmem:[%s5 + $0x38] sm:$0xff]
    %v414 = vld [vmem:[%s5 + $0x40] sm:$0xff]
    %v415 = vld [vmem:[%s5 + $0x48] sm:$0xff]
    %v416 = vld [vmem:[%s5 + $0x50] sm:$0xff]
    %v417 = vld [vmem:[%s5 + $0x58] sm:$0xff]
    %v418 = vld [vmem:[%s5 + $0x60] sm:$0xff]
    %v419 = vld [vmem:[%s5 + $0x68] sm:$0xff]
    %v420 = vld [vmem:[%s5 + $0x70] sm:$0xff]
    %v421 = vld [vmem:[%s5 + $0x78] sm:$0xff]
    %v422 = vld [vmem:[%s5 + $0x80] sm:$0xff]
    %v423 = vld [vmem:[%s5 + $0x88] sm:$0xff]
    %v424 = vld [vmem:[%s5 + $0x90] sm:$0xff]
    %v425 = vld [vmem:[%s5 + $0x98] sm:$0xff]
    %v426 = vld [vmem:[%s5 + $0xa0] sm:$0xff]
    %v427 = vld [vmem:[%s5 + $0xa8] sm:$0xff]
    %v428 = vld [vmem:[%s5 + $0xb0] sm:$0xff]
    %v429 = vld [vmem:[%s5 + $0xb8] sm:$0xff]
    %v430 = vld [vmem:[%s5 + $0xc0] sm:$0xff]
    %v431 = vld [vmem:[%s5 + $0xc8] sm:$0xff]
    %v432 = vld [vmem:[%s5 + $0xd0] sm:$0xff]
    %v433 = vld [vmem:[%s5 + $0xd8] sm:$0xff]
    %v434 = vld [vmem:[%s5 + $0xe0] sm:$0xff]
    %v435 = vld [vmem:[%s5 + $0xe8] sm:$0xff]
    %v436 = vld [vmem:[%s5 + $0xf0] sm:$0xff]
    %v437 = vld [vmem:[%s5 + $0xf8] sm:$0xff]
    %v438 = vld [vmem:[%s5 + $0x100] sm:$0xff]
    %v439 = vld [vmem:[%s5 + $0x108] sm:$0xff]
    %v440 = vld [vmem:[%s5 + $0x110] sm:$0xff]
    %v441 = vld [vmem:[%s5 + $0x118] sm:$0xff]
    %v442 = vld [vmem:[%s5 + $0x120] sm:$0xff]
    %v443 = vld [vmem:[%s5 + $0x128] sm:$0xff]
    %v444 = vld [vmem:[%s5 + $0x130] sm:$0xff]
    %v445 = vld [vmem:[%s5 + $0x138] sm:$0xff]
    %v446 = vld [vmem:[%s5 + $0x140] sm:$0xff]
    %v447 = vld [vmem:[%s5 + $0x148] sm:$0xff]
    %v448 = vld [vmem:[%s5 + $0x150] sm:$0xff]
    %v449 = vld [vmem:[%s5 + $0x158] sm:$0xff]
    %v450 = vld [vmem:[%s5 + $0x160] sm:$0xff]
    %v451 = vld [vmem:[%s5 + $0x168] sm:$0xff]
    %v452 = vld [vmem:[%s5 + $0x170] sm:$0xff]
    %v453 = vld [vmem:[%s5 + $0x178] sm:$0xff]
    %v454 = vld [vmem:[%s5 + $0x180] sm:$0xff]
    %v455 = vld [vmem:[%s5 + $0x188] sm:$0xff]
    %v456 = vld [vmem:[%s5 + $0x190] sm:$0xff]
    %v457 = vld [vmem:[%s5 + $0x198] sm:$0xff]
    %v458 = vld [vmem:[%s5 + $0x1a0] sm:$0xff]
    %v459 = vld [vmem:[%s5 + $0x1a8] sm:$0xff]
    %v460 = vld [vmem:[%s5 + $0x1b0] sm:$0xff]
    %v461 = vld [vmem:[%s5 + $0x1b8] sm:$0xff]
    %v462 = vld [vmem:[%s5 + $0x1c0] sm:$0xff]
    %v463 = vld [vmem:[%s5 + $0x1c8] sm:$0xff]
    %v464 = vld [vmem:[%s5 + $0x1d0] sm:$0xff]
    %v465 = vld [vmem:[%s5 + $0x1d8] sm:$0xff]
    %v466 = vld [vmem:[%s5 + $0x1e0] sm:$0xff]
    %v467 = vld [vmem:[%s5 + $0x1e8] sm:$0xff]
    %v468 = vld [vmem:[%s5 + $0x1f0] sm:$0xff]
    %v469 = vld [vmem:[%s5 + $0x1f8] sm:$0xff]
    %v470 = vld [vmem:[%s6] sm:$0x3]
    %v472 = vlaneseq
    %v473 = vshrl.u32 %v472, 7
    %v474 = vsub.s32 0, %v473
    %v475 = vrot.slane %v470, %v474
    %v476 = vlaneseq
    %v477 = vshrl.u32 %v476, 7
    %v478 = vsub.s32 1, %v477
    %v479 = vrot.slane %v470, %v478
    %482 = vmatprep.subr.mxu0 %v407
    %483 = vmatpush1.msra.mxu0 %v406
    %484 = vmatprep.subr.mxu0 %v409
    %485 = vmatpush1.msra.mxu0 %v408
    %486 = vmatprep.subr.mxu0 %v411
    %487 = vmatpush1.msra.mxu0 %v410
    %488 = vmatprep.subr.mxu0 %v413
    %489 = vmatpush1.msra.mxu0 %v412
    %490 = vmatprep.subr.mxu0 %v415
    %491 = vmatpush1.msra.mxu0 %v414
    %492 = vmatprep.subr.mxu0 %v417
    %493 = vmatpush1.msra.mxu0 %v416
    %494 = vmatprep.subr.mxu0 %v419
    %495 = vmatpush1.msra.mxu0 %v418
    %496 = vmatprep.subr.mxu0 %v421
    %497 = vmatpush1.msra.mxu0 %v420
    %498 = vmatprep.subr.mxu0 %v423
    %499 = vmatpush1.msra.mxu0 %v422
    %500 = vmatprep.subr.mxu0 %v425
    %501 = vmatpush1.msra.mxu0 %v424
    %502 = vmatprep.subr.mxu0 %v427
    %503 = vmatpush1.msra.mxu0 %v426
    %504 = vmatprep.subr.mxu0 %v429
    %505 = vmatpush1.msra.mxu0 %v428
    %506 = vmatprep.subr.mxu0 %v431
    %507 = vmatpush1.msra.mxu0 %v430
    %508 = vmatprep.subr.mxu0 %v433
    %509 = vmatpush1.msra.mxu0 %v432
    %510 = vmatprep.subr.mxu0 %v435
    %511 = vmatpush1.msra.mxu0 %v434
    %512 = vmatprep.subr.mxu0 %v437
    %513 = vmatpush1.msra.mxu0 %v436
    %514 = vmatprep.subr.mxu0 %v439
    %515 = vmatpush1.msra.mxu0 %v438
    %516 = vmatprep.subr.mxu0 %v441
    %517 = vmatpush1.msra.mxu0 %v440
    %518 = vmatprep.subr.mxu0 %v443
    %519 = vmatpush1.msra.mxu0 %v442
    %520 = vmatprep.subr.mxu0 %v445
    %521 = vmatpush1.msra.mxu0 %v444
    %522 = vmatprep.subr.mxu0 %v447
    %523 = vmatpush1.msra.mxu0 %v446
    %524 = vmatprep.subr.mxu0 %v449
    %525 = vmatpush1.msra.mxu0 %v448
    %526 = vmatprep.subr.mxu0 %v451
    %527 = vmatpush1.msra.mxu0 %v450
    %528 = vmatprep.subr.mxu0 %v453
    %529 = vmatpush1.msra.mxu0 %v452
    %530 = vmatprep.subr.mxu0 %v455
    %531 = vmatpush1.msra.mxu0 %v454
    %532 = vmatprep.subr.mxu0 %v457
    %533 = vmatpush1.msra.mxu0 %v456
    %534 = vmatprep.subr.mxu0 %v459
    %535 = vmatpush1.msra.mxu0 %v458
    %536 = vmatprep.subr.mxu0 %v461
    %537 = vmatpush1.msra.mxu0 %v460
    %538 = vmatprep.subr.mxu0 %v463
    %539 = vmatpush1.msra.mxu0 %v462
    %540 = vmatprep.subr.mxu0 %v465
    %541 = vmatpush1.msra.mxu0 %v464
    %542 = vmatprep.subr.mxu0 %v467
    %543 = vmatpush1.msra.mxu0 %v466
    %544 = vmatprep.subr.mxu0 %v469
    %545 = vmatpush1.msra.mxu0 %v468
    %546 = vmatprep.mubr.f32.mxu0 %v391
    %547 = vmatmul.mubr.f32.gmra.mrb[0].mxu0 %v390
    %v548 = vpop.f32.mrb[0].mxu0
    %v549 = vadd.f32 %v475, %v548
    %v550 = vpop.f32.mrb[0].mxu0
    %v551 = vadd.f32 %v479, %v550
    %552 = vmatprep.mubr.f32.mxu0 %v393
    %553 = vmatmul.mubr.f32.gmra.mrb[0].mxu0 %v392
    %v554 = vpop.f32.mrb[0].mxu0
    %v555 = vadd.f32 %v475, %v554
    %v556 = vpop.f32.mrb[0].mxu0
    %v557 = vadd.f32 %v479, %v556
    %558 = vmatprep.mubr.f32.mxu0 %v395
    %559 = vmatmul.mubr.f32.gmra.mrb[0].mxu0 %v394
    %v560 = vpop.f32.mrb[0].mxu0
    %v561 = vadd.f32 %v475, %v560
    %v562 = vpop.f32.mrb[0].mxu0
    %v563 = vadd.f32 %v479, %v562
    %564 = vmatprep.mubr.f32.mxu0 %v397
    %565 = vmatmul.mubr.f32.gmra.mrb[0].mxu0 %v396
    %v566 = vpop.f32.mrb[0].mxu0
    %v567 = vadd.f32 %v475, %v566
    %v568 = vpop.f32.mrb[0].mxu0
    %v569 = vadd.f32 %v479, %v568
    %570 = vmatprep.mubr.f32.mxu0 %v399
    %571 = vmatmul.mubr.f32.gmra.mrb[0].mxu0 %v398
    %v572 = vpop.f32.mrb[0].mxu0
    %v573 = vadd.f32 %v475, %v572
    %v574 = vpop.f32.mrb[0].mxu0
    %v575 = vadd.f32 %v479, %v574
    %576 = vmatprep.mubr.f32.mxu0 %v401
    %577 = vmatmul.mubr.f32.gmra.mrb[0].mxu0 %v400
    %v578 = vpop.f32.mrb[0].mxu0
    %v579 = vadd.f32 %v475, %v578
    %v580 = vpop.f32.mrb[0].mxu0
    %v581 = vadd.f32 %v479, %v580
    %582 = vmatprep.mubr.f32.mxu0 %v403
    %583 = vmatmul.mubr.f32.gmra.mrb[0].mxu0 %v402
    %v584 = vpop.f32.mrb[0].mxu0
    %v585 = vadd.f32 %v475, %v584
    %v586 = vpop.f32.mrb[0].mxu0
    %v587 = vadd.f32 %v479, %v586
    %588 = vmatprep.mubr.f32.mxu0 %v405
    %589 = vmatmul.mubr.f32.gmra.mrb[0].mxu0 %v404
    %v590 = vpop.f32.mrb[0].mxu0
    %v591 = vadd.f32 %v475, %v590
    %v592 = vpop.f32.mrb[0].mxu0
    %v593 = vadd.f32 %v479, %v592
    %594 = vdwg.mxu0
    %vm595 = vcmp.gt.f32.partialorder %v549, 0.0
    %vm596 = vcmp.gt.f32.partialorder %v551, 0.0
    %vm597 = vcmp.gt.f32.partialorder %v555, 0.0
    %vm598 = vcmp.gt.f32.partialorder %v557, 0.0
    %vm599 = vcmp.gt.f32.partialorder %v561, 0.0
    %vm600 = vcmp.gt.f32.partialorder %v563, 0.0
    %vm601 = vcmp.gt.f32.partialorder %v567, 0.0
    %vm602 = vcmp.gt.f32.partialorder %v569, 0.0
    %vm603 = vcmp.gt.f32.partialorder %v573, 0.0
    %vm604 = vcmp.gt.f32.partialorder %v575, 0.0
    %vm605 = vcmp.gt.f32.partialorder %v579, 0.0
    %vm606 = vcmp.gt.f32.partialorder %v581, 0.0
    %vm607 = vcmp.gt.f32.partialorder %v585, 0.0
    %vm608 = vcmp.gt.f32.partialorder %v587, 0.0
    %vm609 = vcmp.gt.f32.partialorder %v591, 0.0
    %vm610 = vcmp.gt.f32.partialorder %v593, 0.0
    %v611 = vmul.f32 %v549, 1.442695
    %v612 = vpow.pop %v611
    %v613 = vmul.f32 %v551, 1.442695
    %v614 = vpow.pop %v613
    %v615 = vmul.f32 %v555, 1.442695
    %v616 = vpow.pop %v615
    %v617 = vmul.f32 %v557, 1.442695
    %v618 = vpow.pop %v617
    %v619 = vmul.f32 %v561, 1.442695
    %v620 = vpow.pop %v619
    %v621 = vmul.f32 %v563, 1.442695
    %v622 = vpow.pop %v621
    %v623 = vmul.f32 %v567, 1.442695
    %v624 = vpow.pop %v623
    %v625 = vmul.f32 %v569, 1.442695
    %v626 = vpow.pop %v625
    %v627 = vmul.f32 %v573, 1.442695
    %v628 = vpow.pop %v627
    %v629 = vmul.f32 %v575, 1.442695
    %v630 = vpow.pop %v629
    %v631 = vmul.f32 %v579, 1.442695
    %v632 = vpow.pop %v631
    %v633 = vmul.f32 %v581, 1.442695
    %v634 = vpow.pop %v633
    %v635 = vmul.f32 %v585, 1.442695
    %v636 = vpow.pop %v635
    %v637 = vmul.f32 %v587, 1.442695
    %v638 = vpow.pop %v637
    %v639 = vmul.f32 %v591, 1.442695
    %v640 = vpow.pop %v639
    %v641 = vmul.f32 %v593, 1.442695
    %v642 = vpow.pop %v641
    %v643 = vmul.f32 %v612, 1.6732632
    %v644 = vmul.f32 %v614, 1.6732632
    %v645 = vmul.f32 %v616, 1.6732632
    %v646 = vmul.f32 %v618, 1.6732632
    %v647 = vmul.f32 %v620, 1.6732632
    %v648 = vmul.f32 %v622, 1.6732632
    %v649 = vmul.f32 %v624, 1.6732632
    %v650 = vmul.f32 %v626, 1.6732632
    %v651 = vmul.f32 %v628, 1.6732632
    %v652 = vmul.f32 %v630, 1.6732632
    %v653 = vmul.f32 %v632, 1.6732632
    %v654 = vmul.f32 %v634, 1.6732632
    %v655 = vmul.f32 %v636, 1.6732632
    %v656 = vmul.f32 %v638, 1.6732632
    %v657 = vmul.f32 %v640, 1.6732632
    %v658 = vmul.f32 %v642, 1.6732632
    %v659 = vsub.f32 %v643, 1.6732632
    %v660 = vsub.f32 %v644, 1.6732632
    %v661 = vsub.f32 %v645, 1.6732632
    %v662 = vsub.f32 %v646, 1.6732632
    %v663 = vsub.f32 %v647, 1.6732632
    %v664 = vsub.f32 %v648, 1.6732632
    %v665 = vsub.f32 %v649, 1.6732632
    %v666 = vsub.f32 %v650, 1.6732632
    %v667 = vsub.f32 %v651, 1.6732632
    %v668 = vsub.f32 %v652, 1.6732632
    %v669 = vsub.f32 %v653, 1.6732632
    %v670 = vsub.f32 %v654, 1.6732632
    %v671 = vsub.f32 %v655, 1.6732632
    %v672 = vsub.f32 %v656, 1.6732632
    %v673 = vsub.f32 %v657, 1.6732632
    %v674 = vsub.f32 %v658, 1.6732632
    %v675 = vsel %vm595, %v549, %v659
    %v676 = vsel %vm596, %v551, %v660
    %v677 = vsel %vm597, %v555, %v661
    %v678 = vsel %vm598, %v557, %v662
    %v679 = vsel %vm599, %v561, %v663
    %v680 = vsel %vm600, %v563, %v664
    %v681 = vsel %vm601, %v567, %v665
    %v682 = vsel %vm602, %v569, %v666
    %v683 = vsel %vm603, %v573, %v667
    %v684 = vsel %vm604, %v575, %v668
    %v685 = vsel %vm605, %v579, %v669
    %v686 = vsel %vm606, %v581, %v670
    %v687 = vsel %vm607, %v585, %v671
    %v688 = vsel %vm608, %v587, %v672
    %v689 = vsel %vm609, %v591, %v673
    %v690 = vsel %vm610, %v593, %v674
    %v691 = vmul.f32 %v675, 1.050701
    %v692 = vmul.f32 %v676, 1.050701
    %v693 = vmul.f32 %v677, 1.050701
    %v694 = vmul.f32 %v678, 1.050701
    %v695 = vmul.f32 %v679, 1.050701
    %v696 = vmul.f32 %v680, 1.050701
    %v697 = vmul.f32 %v681, 1.050701
    %v698 = vmul.f32 %v682, 1.050701
    %v699 = vmul.f32 %v683, 1.050701
    %v700 = vmul.f32 %v684, 1.050701
    %v701 = vmul.f32 %v685, 1.050701
    %v702 = vmul.f32 %v686, 1.050701
    %v703 = vmul.f32 %v687, 1.050701
    %v704 = vmul.f32 %v688, 1.050701
    %v705 = vmul.f32 %v689, 1.050701
    %v706 = vmul.f32 %v690, 1.050701
    %707 = vst [vmem:[#allocation2] sm:$0xff] %v691
    %vm708 = vcmask 588800
    %709 = vst.msk [vmem:[#allocation2 + $0x8] sm:$0xff] %vm708, %v692
    %710 = vst [vmem:[#allocation2 + $0x10] sm:$0xff] %v693
    %711 = vst.msk [vmem:[#allocation2 + $0x18] sm:$0xff] %vm708, %v694
    %712 = vst [vmem:[#allocation2 + $0x20] sm:$0xff] %v695
    %713 = vst.msk [vmem:[#allocation2 + $0x28] sm:$0xff] %vm708, %v696
    %714 = vst [vmem:[#allocation2 + $0x30] sm:$0xff] %v697
    %715 = vst.msk [vmem:[#allocation2 + $0x38] sm:$0xff] %vm708, %v698
    %716 = vst [vmem:[#allocation2 + $0x40] sm:$0xff] %v699
    %717 = vst.msk [vmem:[#allocation2 + $0x48] sm:$0xff] %vm708, %v700
    %718 = vst [vmem:[#allocation2 + $0x50] sm:$0xff] %v701
    %719 = vst.msk [vmem:[#allocation2 + $0x58] sm:$0xff] %vm708, %v702
    %720 = vst [vmem:[#allocation2 + $0x60] sm:$0xff] %v703
    %721 = vst.msk [vmem:[#allocation2 + $0x68] sm:$0xff] %vm708, %v704
    %722 = vst [vmem:[#allocation2 + $0x70] sm:$0xff] %v705
    %723 = vst.msk [vmem:[#allocation2 + $0x78] sm:$0xff] %vm708, %v706
    // Predicated region
    $region30: #{tpu_custom_call.1} parent=1 // pred_check
      _
    $region31: #{tpu_custom_call.1} parent=1 // pred_check_branch
      %725 = sbr.rel (0) target = $region33
    $region32: #{tpu_custom_call.1} parent=1 // pred_region
      %s727 = ssub.s32 2048, 2048
      %728 = vsyncadd [#allocation3], %s727
      %s729 = sshll.u32 [#allocation2], 4
      %s730 = int_to_ptr.vmem [resolvable:$true] %s729
      %735 = dma.vmem_to_hbm [thread:$0]  %s730, 2048, %s7, [#allocation3], 256, 256, 16
    $region33: #{tpu_custom_call.1} parent=1 // pred_fallthru
      _
    // Predicated region
    $region34: #{tpu_custom_call.1} parent=1 // pred_check
      _
    $region35: #{tpu_custom_call.1} parent=1 // pred_check_branch
      %737 = sbr.rel (0) target = $region37
    $region36: #{tpu_custom_call.1} parent=1 // pred_region
      %738 = dma.done [#allocation3], 2048
    $region37: #{tpu_custom_call.1} parent=1 // pred_fallthru
      _
    %739 = vsyncpa [#allocation3], 1

</llo_original>
